<compile_context>
chip_gen: v5e
topology: v5e:2x2
jax: 0.10.0
libtpu: 0.0.40
codegen_flags: <defaults>
</compile_context>

<pallas_src>
import jax
import jax.numpy as jnp
from jax.experimental import pallas as pl
from jax.experimental.pallas import tpu as pltpu

_EPS = 1e-8  # TODO(synk): exact eps/clamp convention of YOLOVXTool.iou not shown; tiny clamp used.


def _round_up(x: int, m: int) -> int:
    return (x + m - 1) // m * m


def _iou_kernel(gt_ref, pre_t_ref, out_ref):
    # gt_ref:    (TG, 4)  tile of gt boxes              (TG on sublanes)
    # pre_t_ref: (4, TP)  tile of transposed pre boxes  (TP on lanes)
    # out_ref:   (TG, TP) tile of the pairwise IoU matrix
    gt = gt_ref[...]
    pre = pre_t_ref[...]

    gx1 = gt[:, 0:1]
    gy1 = gt[:, 1:2]
    gx2 = gt[:, 2:3]
    gy2 = gt[:, 3:4]

    px1 = pre[0:1, :]
    py1 = pre[1:2, :]
    px2 = pre[2:3, :]
    py2 = pre[3:4, :]

    # Intersection, (TG, TP).
    iw = jnp.maximum(jnp.minimum(gx2, px2) - jnp.maximum(gx1, px1), 0.0)
    ih = jnp.maximum(jnp.minimum(gy2, py2) - jnp.maximum(gy1, py1), 0.0)
    inter = iw * ih

    # Areas. area_g is invariant along the P grid axis but only costs ~3 VPU ops on a
    # (TG, 1) slab; recomputing it keeps both grid axes "parallel" (megacore-friendly)
    # instead of adding a scratch + pl.when dependency on the P axis.
    area_g = (gx2 - gx1) * (gy2 - gy1)   # (TG, 1)
    area_p = (px2 - px1) * (py2 - py1)   # (1, TP)

    union = jnp.maximum(area_g + area_p - inter, _EPS)

    # EUP approximate reciprocal + one Newton-Raphson refinement -> ~full f32 accuracy
    # without a serialized divide on the VALU-bound path.
    r = pl.reciprocal(union, approx=True)
    r = r * (2.0 - union * r)
    out_ref[...] = inter * r


def iou_more_to_more(gt_boxes: jax.Array, pre_boxes: jax.Array,
                     *, tile_g: int = 256, tile_p: int = 1024) -> jax.Array:
    """gt_boxes: (G, 4), pre_boxes: (P, 4) -> (G, P) float32 pairwise IoU."""
    G = int(gt_boxes.shape[0])
    P = int(pre_boxes.shape[0])
    if G == 0 or P == 0:
        return jnp.zeros((G, P), jnp.float32)

    gt = gt_boxes.astype(jnp.float32)
    pre = pre_boxes.astype(jnp.float32)

    # Align requested tiles to the (8, 128) register tiling and clamp to the problem size.
    tile_g = max(8, _round_up(tile_g, 8))
    tile_p = max(128, _round_up(tile_p, 128))
    tg = min(tile_g, _round_up(G, 8))
    tp = min(tile_p, _round_up(P, 128))

    # Pad to whole tiles (no assert on arbitrary P/G). Padded boxes are all-zero ->
    # inter = 0 -> IoU = 0, and the padded rows/columns are sliced off below.
    g_pad = _round_up(G, tg)
    p_pad = _round_up(P, tp)
    if g_pad != G:
        gt = jnp.pad(gt, ((0, g_pad - G), (0, 0)))
    if p_pad != P:
        pre = jnp.pad(pre, ((0, p_pad - P), (0, 0)))

    # One-time layout-only transpose so the box axis lands on lanes inside the kernel.
    pre_t = pre.T  # (4, p_pad)

    grid = (g_pad // tg, p_pad // tp)

    # Double-buffered VMEM footprint (minor dims pad to full (8,128) tiles in VMEM).
    vmem_need = 2 * (tg * tp * 4        # output tile
                     + tg * 128 * 4     # gt tile, lane-padded
                     + 8 * tp * 4)      # pre tile, sublane-padded
    compiler_kwargs = dict(dimension_semantics=("parallel", "parallel"))
    if vmem_need > 12 * 1024 * 1024:
        # Caller asked for larger-than-default tiles: raise the scoped-VMEM limit
        # explicitly (v5e default 16 MiB scoped, v6e/v7x 32 MiB; v7x physical cap 64 MiB).
        compiler_kwargs["vmem_limit_bytes"] = int(vmem_need * 1.25)

    out = pl.pallas_call(
        _iou_kernel,
        out_shape=jax.ShapeDtypeStruct((g_pad, p_pad), jnp.float32),
        grid_spec=pltpu.PrefetchScalarGridSpec(
            num_scalar_prefetch=0,
            grid=grid,
            in_specs=[
                pl.BlockSpec((tg, 4), lambda gi, pj: (gi, 0)),   # gt tile (varies with gi)
                pl.BlockSpec((4, tp), lambda gi, pj: (0, pj)),   # transposed pre tile
            ],
            out_specs=pl.BlockSpec((tg, tp), lambda gi, pj: (gi, pj)),
        ),
        compiler_params=pltpu.CompilerParams(**compiler_kwargs),
    )(gt, pre_t)

    if g_pad != G or p_pad != P:
        out = out[:G, :P]
    return out


def _reference_iou(gt_boxes, pre_boxes):
    # Pure-JAX reference mirroring the PyTorch loop (one gt row vs all pre boxes).
    g = gt_boxes[:, None, :].astype(jnp.float32)   # (G, 1, 4)
    p = pre_boxes[None, :, :].astype(jnp.float32)  # (1, P, 4)
    ix1 = jnp.maximum(g[..., 0], p[..., 0])
    iy1 = jnp.maximum(g[..., 1], p[..., 1])
    ix2 = jnp.minimum(g[..., 2], p[..., 2])
    iy2 = jnp.minimum(g[..., 3], p[..., 3])
    inter = jnp.maximum(ix2 - ix1, 0.0) * jnp.maximum(iy2 - iy1, 0.0)
    area_g = (g[..., 2] - g[..., 0]) * (g[..., 3] - g[..., 1])
    area_p = (p[..., 2] - p[..., 0]) * (p[..., 3] - p[..., 1])
    union = area_g + area_p - inter
    return inter / jnp.maximum(union, _EPS)


def _make_boxes(key, n):
    k1, k2 = jax.random.split(key)
    xy = jax.random.uniform(k1, (n, 2), minval=0.0, maxval=600.0)
    wh = jax.random.uniform(k2, (n, 2), minval=4.0, maxval=40.0)
    return jnp.concatenate([xy, xy + wh], axis=-1).astype(jnp.float32)


if __name__ == "__main__":
    key = jax.random.PRNGKey(0)
    kg, kp, kg2, kp2 = jax.random.split(key, 4)

    # Case 1: tile-aligned small shapes.
    gt_boxes = _make_boxes(kg, 8)       # (8, 4)
    pre_boxes = _make_boxes(kp, 256)    # (256, 4)
    out = jax.block_until_ready(iou_more_to_more(gt_boxes, pre_boxes))
    ref = _reference_iou(gt_boxes, pre_boxes)
    assert out.shape == (8, 256)
    assert jnp.allclose(out, ref, atol=1e-4, rtol=1e-4)

    # Case 2: arbitrary (non multiple-of-128) shapes exercise the padding path.
    gt_boxes2 = _make_boxes(kg2, 5)     # (5, 4)
    pre_boxes2 = _make_boxes(kp2, 200)  # (200, 4)
    out2 = jax.block_until_ready(iou_more_to_more(gt_boxes2, pre_boxes2))
    ref2 = _reference_iou(gt_boxes2, pre_boxes2)
    assert out2.shape == (5, 200)
    assert jnp.allclose(out2, ref2, atol=1e-4, rtol=1e-4)

    print("KERNEL_OK")
</pallas_src>

<mosaic_0001>
module attributes {stable_mosaic.version = 11 : i64} {
  func.func @_iou_kernel(%arg0: i32, %arg1: i32, %arg2: memref<8x4xf32, #tpu.memory_space<vmem>>, %arg3: memref<4x256xf32, #tpu.memory_space<vmem>>, %arg4: memref<8x256xf32, #tpu.memory_space<vmem>>) attributes {dimension_semantics = [#tpu.dimension_semantics<parallel>, #tpu.dimension_semantics<parallel>], iteration_bounds = array<i64: 1, 1>, scalar_prefetch = 0 : i64, scratch_operands = 0 : i64, tpu.core_type = #tpu.core_type<tc>, window_params = [{transform_indices = @transform_0, window_bounds = array<i64: 8, 4>}, {transform_indices = @transform_1, window_bounds = array<i64: 4, 256>}, {transform_indices = @transform_2, window_bounds = array<i64: 8, 256>}]} {
    %c0 = arith.constant 0 : index
    %c0_0 = arith.constant 0 : index
    %0 = vector.load %arg2[%c0, %c0_0] : memref<8x4xf32, #tpu.memory_space<vmem>>, vector<8x4xf32>
    %c0_1 = arith.constant 0 : index
    %c0_2 = arith.constant 0 : index
    %1 = vector.load %arg3[%c0_1, %c0_2] : memref<4x256xf32, #tpu.memory_space<vmem>>, vector<4x256xf32>
    %2 = vector.extract_strided_slice %0 {offsets = [0, 0], sizes = [8, 1], strides = [1, 1]} : vector<8x4xf32> to vector<8x1xf32>
    %3 = vector.extract_strided_slice %0 {offsets = [0, 1], sizes = [8, 1], strides = [1, 1]} : vector<8x4xf32> to vector<8x1xf32>
    %4 = vector.extract_strided_slice %0 {offsets = [0, 2], sizes = [8, 1], strides = [1, 1]} : vector<8x4xf32> to vector<8x1xf32>
    %5 = vector.extract_strided_slice %0 {offsets = [0, 3], sizes = [8, 1], strides = [1, 1]} : vector<8x4xf32> to vector<8x1xf32>
    %6 = vector.extract_strided_slice %1 {offsets = [0, 0], sizes = [1, 256], strides = [1, 1]} : vector<4x256xf32> to vector<1x256xf32>
    %7 = vector.extract_strided_slice %1 {offsets = [1, 0], sizes = [1, 256], strides = [1, 1]} : vector<4x256xf32> to vector<1x256xf32>
    %8 = vector.extract_strided_slice %1 {offsets = [2, 0], sizes = [1, 256], strides = [1, 1]} : vector<4x256xf32> to vector<1x256xf32>
    %9 = vector.extract_strided_slice %1 {offsets = [3, 0], sizes = [1, 256], strides = [1, 1]} : vector<4x256xf32> to vector<1x256xf32>
    %10 = vector.broadcast %4 : vector<8x1xf32> to vector<8x256xf32>
    %11 = vector.broadcast %8 : vector<1x256xf32> to vector<8x256xf32>
    %12 = arith.minimumf %10, %11 : vector<8x256xf32>
    %13 = vector.broadcast %2 : vector<8x1xf32> to vector<8x256xf32>
    %14 = vector.broadcast %6 : vector<1x256xf32> to vector<8x256xf32>
    %15 = arith.maximumf %13, %14 : vector<8x256xf32>
    %16 = arith.subf %12, %15 : vector<8x256xf32>
    %cst = arith.constant 0.000000e+00 : f32
    %17 = vector.broadcast %cst : f32 to vector<8x256xf32>
    %18 = arith.maximumf %16, %17 : vector<8x256xf32>
    %19 = vector.broadcast %5 : vector<8x1xf32> to vector<8x256xf32>
    %20 = vector.broadcast %9 : vector<1x256xf32> to vector<8x256xf32>
    %21 = arith.minimumf %19, %20 : vector<8x256xf32>
    %22 = vector.broadcast %3 : vector<8x1xf32> to vector<8x256xf32>
    %23 = vector.broadcast %7 : vector<1x256xf32> to vector<8x256xf32>
    %24 = arith.maximumf %22, %23 : vector<8x256xf32>
    %25 = arith.subf %21, %24 : vector<8x256xf32>
    %cst_3 = arith.constant 0.000000e+00 : f32
    %26 = vector.broadcast %cst_3 : f32 to vector<8x256xf32>
    %27 = arith.maximumf %25, %26 : vector<8x256xf32>
    %28 = arith.mulf %18, %27 : vector<8x256xf32>
    %29 = arith.subf %4, %2 : vector<8x1xf32>
    %30 = arith.subf %5, %3 : vector<8x1xf32>
    %31 = arith.mulf %29, %30 : vector<8x1xf32>
    %32 = arith.subf %8, %6 : vector<1x256xf32>
    %33 = arith.subf %9, %7 : vector<1x256xf32>
    %34 = arith.mulf %32, %33 : vector<1x256xf32>
    %35 = vector.broadcast %31 : vector<8x1xf32> to vector<8x256xf32>
    %36 = vector.broadcast %34 : vector<1x256xf32> to vector<8x256xf32>
    %37 = arith.addf %35, %36 : vector<8x256xf32>
    %38 = arith.subf %37, %28 : vector<8x256xf32>
    %cst_4 = arith.constant 9.99999993E-9 : f32
    %39 = vector.broadcast %cst_4 : f32 to vector<8x256xf32>
    %40 = arith.maximumf %38, %39 : vector<8x256xf32>
    %41 = tpu.reciprocal %40 {approx = true} : vector<8x256xf32> -> vector<8x256xf32>
    %42 = arith.mulf %40, %41 : vector<8x256xf32>
    %cst_5 = arith.constant 2.000000e+00 : f32
    %43 = vector.broadcast %cst_5 : f32 to vector<8x256xf32>
    %44 = arith.subf %43, %42 : vector<8x256xf32>
    %45 = arith.mulf %41, %44 : vector<8x256xf32>
    %46 = arith.mulf %28, %45 : vector<8x256xf32>
    %c0_6 = arith.constant 0 : index
    %c0_7 = arith.constant 0 : index
    %47 = vector.load %arg4[%c0_6, %c0_7] : memref<8x256xf32, #tpu.memory_space<vmem>>, vector<8x256xf32>
    tpu.vector_store %arg4[%c0_6, %c0_7], %46 {strides = array<i32>} : memref<8x256xf32, #tpu.memory_space<vmem>>, vector<8x256xf32>,
    return
  }
  func.func @transform_0(%arg0: i32, %arg1: i32) -> (i32, i32) {
    %c0_i32 = arith.constant 0 : i32
    %c0_i32_0 = arith.constant 0 : i32
    return %arg0, %c0_i32 : i32, i32
  }
  func.func @transform_1(%arg0: i32, %arg1: i32) -> (i32, i32) {
    %c0_i32 = arith.constant 0 : i32
    %c0_i32_0 = arith.constant 0 : i32
    return %c0_i32, %arg1 : i32, i32
  }
  func.func @transform_2(%arg0: i32, %arg1: i32) -> (i32, i32) {
    %c0_i32 = arith.constant 0 : i32
    return %arg0, %arg1 : i32, i32
  }
}

</mosaic_0001>

<llo_original>
// kernel: tpu_custom_call.1
$region0: #{tpu_custom_call.1}
  #allocation0 [shape = 'u32[]', space=smem, size = 0x4, offset = 0x4, fixed_abs, tag = 'smem constant byte address 0x4 - core index']
  #allocation1 [shape = 'u32[72,128]{1,0:T(1,128)}', space=vmem, size = 0x9000, scoped, tag = 'internal scratch']
  %s0 = inlined_call_operand.vmem [shape: f32[8,4], index: 0, kind: input, shape index: {}]
  %s1 = inlined_call_operand.vmem [shape: f32[4,256], index: 1, kind: input, shape index: {}]
  %s2 = inlined_call_operand.hbm [shape: f32[8,256], index: 2, kind: output, shape index: {}]
  %s3 = sld [smem:[#allocation0]]
  $region18: #{tpu_custom_call.1} parent=0
    _
  %s5 = ssub.s32 1, %s3
  %s6 = scalar_select 0, %s5, %s3
  $region1: #{tpu_custom_call.1} parent=0
    #allocation2 [shape = 'u8[8192]{0}', space=vmem, size = 0x2000, scoped, tag = 'output window, operand 0, single buffered']
    #allocation3 [shape = 's32[1]{0}', space=sflag, size = 0x4, scoped, tag = 'scoped memory for tpu_custom_call.1']
    %7 = vsyncpa [#allocation3], 0
    // Predicated region
    $region2: #{tpu_custom_call.1} parent=1 // pred_check
      _
    $region3: #{tpu_custom_call.1} parent=1 // pred_check_branch
      %9 = sbr.rel (0) target = $region5
    $region4: #{tpu_custom_call.1} parent=1 // pred_region
      _
    $region5: #{tpu_custom_call.1} parent=1 // pred_fallthru
      _
    // Predicated region
    $region6: #{tpu_custom_call.1} parent=1 // pred_check
      _
    $region7: #{tpu_custom_call.1} parent=1 // pred_check_branch
      %11 = sbr.rel (0) target = $region9
    $region8: #{tpu_custom_call.1} parent=1 // pred_region
      _
    $region9: #{tpu_custom_call.1} parent=1 // pred_fallthru
      _
    %v12 = vld [vmem:[%s0] sm:$0xff]
    %v13 = vld [vmem:[%s1] sm:$0xff]
    %15 = vset.pattern.permute.xlu0 2
    %16 = vperm.xlu0 %15, %v12
    %v17 = vpop.permute.xlu0 %16
    %v20 = vperm.slane %v13, 2
    %v21 = vperm.slane %v13, 6
    %v24 = vperm.slane %v20, 2
    %v25 = vperm.slane %v21, 2
    %v26 = vmin.f32 %v17, %v24
    %v27 = vmin.f32 %v17, %v25
    %28 = vset.pattern.permute.xlu0 0
    %29 = vperm.xlu0 %28, %v12
    %v30 = vpop.permute.xlu0 %29
    %v32 = vperm.slane %v13, 0
    %v33 = vperm.slane %v13, 4
    %v36 = vperm.slane %v32, 0
    %v37 = vperm.slane %v33, 0
    %v38 = vmax.f32 %v30, %v36
    %v39 = vmax.f32 %v30, %v37
    %v40 = vsub.f32 %v26, %v38
    %v41 = vsub.f32 %v27, %v39
    %v42 = vmax.f32 %v40, 0.0
    %v43 = vmax.f32 %v41, 0.0
    %44 = vset.pattern.permute.xlu0 3
    %45 = vperm.xlu0 %44, %v12
    %v46 = vpop.permute.xlu0 %45
    %v48 = vperm.slane %v13, 3
    %v49 = vperm.slane %v13, 7
    %v52 = vperm.slane %v48, 3
    %v53 = vperm.slane %v49, 3
    %v54 = vmin.f32 %v46, %v52
    %v55 = vmin.f32 %v46, %v53
    %56 = vset.pattern.permute.xlu0 1
    %57 = vperm.xlu0 %56, %v12
    %v58 = vpop.permute.xlu0 %57
    %v60 = vperm.slane %v13, 1
    %v61 = vperm.slane %v13, 5
    %v64 = vperm.slane %v60, 1
    %v65 = vperm.slane %v61, 1
    %v66 = vmax.f32 %v58, %v64
    %v67 = vmax.f32 %v58, %v65
    %v68 = vsub.f32 %v54, %v66
    %v69 = vsub.f32 %v55, %v67
    %v70 = vmax.f32 %v68, 0.0
    %v71 = vmax.f32 %v69, 0.0
    %v72 = vmul.f32 %v42, %v70
    %v73 = vmul.f32 %v43, %v71
    %74 = vrot.lane.b32.xlu0 %v12, 2
    %v75 = vpop.permute.xlu0 %74
    %v77 = vsub.f32 %v12, %v75
    %79 = vrot.lane.b32.xlu0 %v77, 127
    %v80 = vpop.permute.xlu0 %79
    %v82 = vmul.f32 %v77, %v80
    %v83 = vrot.slane %v13, 6
    %v85 = vsub.f32 %v13, %v83
    %v87 = vrot.slane %v85, 5
    %v88 = vrot.slane %v87, 4
    %v90 = vmul.f32 %v85, %v88
    %92 = vset.pattern.permute.xlu0 2
    %93 = vperm.xlu0 %92, %v82
    %v94 = vpop.permute.xlu0 %93
    %v97 = vperm.slane %v90, 2
    %v98 = vperm.slane %v90, 6
    %v101 = vperm.slane %v97, 2
    %v102 = vperm.slane %v98, 2
    %v103 = vadd.f32 %v94, %v101
    %v104 = vadd.f32 %v94, %v102
    %v105 = vsub.f32 %v103, %v72
    %v106 = vsub.f32 %v104, %v73
    %v107 = vmax.f32 %v105, 1e-08
    %v108 = vmax.f32 %v106, 1e-08
    %v109 = vrcp.pop %v107
    %v110 = vrcp.pop %v108
    %v111 = vmul.f32 %v107, %v109
    %v112 = vmul.f32 %v108, %v110
    %v113 = vsub.f32 2.0, %v111
    %v114 = vsub.f32 2.0, %v112
    %v115 = vmul.f32 %v109, %v113
    %v116 = vmul.f32 %v110, %v114
    %v117 = vmul.f32 %v72, %v115
    %v118 = vmul.f32 %v73, %v116
    %119 = vst [vmem:[#allocation2] sm:$0xff] %v117
    %120 = vst [vmem:[#allocation2 + $0x8] sm:$0xff] %v118
    // Predicated region
    $region10: #{tpu_custom_call.1} parent=1 // pred_check
      _
    $region11: #{tpu_custom_call.1} parent=1 // pred_check_branch
      %122 = sbr.rel (0) target = $region13
    $region12: #{tpu_custom_call.1} parent=1 // pred_region
      %124 = vsyncadd [#allocation3], 0
      %s126 = sshll.u32 [#allocation2], 4
      %s127 = int_to_ptr.vmem [resolvable:$true] %s126
      %s128 = sshll.u32 %s2, 4
      %s129 = int_to_ptr.hbm [resolvable:$true] %s128
      %131 = dma.vmem_to_hbm [thread:$0]  %s127, 256, %s129, [#allocation3]
    $region13: #{tpu_custom_call.1} parent=1 // pred_fallthru
      _
    // Predicated region
    $region14: #{tpu_custom_call.1} parent=1 // pred_check
      _
    $region15: #{tpu_custom_call.1} parent=1 // pred_check_branch
      %133 = sbr.rel (0) target = $region17
    $region16: #{tpu_custom_call.1} parent=1 // pred_region
      %135 = dma.done [#allocation3], 256
    $region17: #{tpu_custom_call.1} parent=1 // pred_fallthru
      _
    %136 = vsyncpa [#allocation3], 1

</llo_original>
